<compile_context>
chip_gen: v7x
topology: tpu7x:2x2x1
jax: 0.10.0
libtpu: 0.0.40
codegen_flags: <defaults>
</compile_context>

<pallas_src>
import functools

import jax
import jax.numpy as jnp
from jax.experimental import pallas as pl
from jax.experimental.pallas import tpu as pltpu


def _round_up(x, m):
    return ((x + m - 1) // m) * m


@functools.lru_cache(maxsize=None)
def _vmem_limit_bytes():
    """Generation-aware scoped-VMEM limit (~75% of physical, capped)."""
    cap = 0
    try:
        info = pltpu.get_tpu_info()
        cap = int(getattr(info, "vmem_capacity_bytes", 0) or 0)
    except Exception:
        cap = 0
    if cap <= 0:
        cap = 64 * 1024 * 1024  # conservative fallback: v7x per-TensorCore VMEM
    return min((cap * 3) // 4, 100 * 1024 * 1024)


# ----------------------------------------------------------------------------
# Kernel 1: patch-embed conv (stride == kernel == patch) as matmul + mask head.
#           Grid (batch, patch-band); weights resident; bf16 MXU operands with
#           f32 accumulation; class-minor output (only the real classes stored).
# ----------------------------------------------------------------------------
def _mask_head_kernel(p_ref, w1_ref, b1_ref, w2_ref, b2_ref, o_ref):
    # p_ref: [tm, K] bf16   w1: [K, D] bf16    b1: [1, D] f32
    # w2: [D, Cpad] bf16    b2: [1, Cpad] f32  o: [C, tm] f32
    c = o_ref.shape[0]
    h = jnp.dot(p_ref[...], w1_ref[...],
                preferred_element_type=jnp.float32) + b1_ref[...]
    # TODO(synk): torch nn.GELU defaults to exact erf; the tanh approximation (EUP
    # path) is kept here since this head is a synthetic surrogate, not a checkpoint.
    h = jax.nn.gelu(h)
    y = jnp.dot(h.astype(jnp.bfloat16), w2_ref[...],
                preferred_element_type=jnp.float32) + b2_ref[...]
    # In-kernel transpose to class-minor layout; store only the real C classes.
    # Lane dim stays dense (tm); HBM writeback drops ~Cpad/C x vs padded stores.
    yt = y.T                                     # [Cpad, tm] via XLU
    o_ref[...] = yt[:c, :].astype(o_ref.dtype)


def mask_head(patches, w1, b1, w2, b2, *, tm_max=2048):
    # patches: [B, Np, K]  ->  [B, C, Np] logits
    b, np_, k = patches.shape
    d = w1.shape[1]
    c = w2.shape[1]

    # Pad the class dim to 128 for the MXU (extra columns are free); only the real
    # C rows are ever written back.
    c_pad = _round_up(max(c, 128), 128)
    w2p = jnp.pad(w2, ((0, 0), (0, c_pad - c))).astype(jnp.bfloat16)
    b2p = jnp.pad(b2, ((0, 0), (0, c_pad - c)))

    vmem_limit = _vmem_limit_bytes()
    # Per-row working set: bf16 patch tile (x2 buffers), f32 hidden, f32 padded
    # logits + transpose, f32 output (x2 buffers), bf16 staging.
    per_row_bytes = 2 * 2 * k + 4 * d + 2 * 4 * c_pad + 2 * 4 * c + 2 * k
    tm_budget = max(256, (vmem_limit // 3) // max(per_row_bytes, 1))
    tm_cap = min(tm_max, tm_budget)
    if np_ > tm_cap:
        tm = max(128, (tm_cap // 128) * 128)   # multiple of 128 -> lane-dense stores
    else:
        tm = _round_up(np_, 8)                 # single band per image
    np_pad = _round_up(np_, tm)

    p = patches.astype(jnp.bfloat16)
    if np_pad != np_:
        p = jnp.pad(p, ((0, 0), (0, np_pad - np_), (0, 0)))

    out = pl.pallas_call(
        _mask_head_kernel,
        out_shape=jax.ShapeDtypeStruct((b, c, np_pad), jnp.float32),
        grid=(b, np_pad // tm),
        in_specs=[
            pl.BlockSpec((None, tm, k), lambda bi, ni: (bi, ni, 0)),   # patches
            pl.BlockSpec((k, d), lambda bi, ni: (0, 0)),               # w1 resident
            pl.BlockSpec((1, d), lambda bi, ni: (0, 0)),               # b1 resident
            pl.BlockSpec((d, c_pad), lambda bi, ni: (0, 0)),           # w2 resident
            pl.BlockSpec((1, c_pad), lambda bi, ni: (0, 0)),           # b2 resident
        ],
        out_specs=pl.BlockSpec((None, c, tm), lambda bi, ni: (bi, 0, ni)),
        compiler_params=pltpu.CompilerParams(
            dimension_semantics=("parallel", "parallel"),
            vmem_limit_bytes=vmem_limit),
    )(p, w1.astype(jnp.bfloat16), b1, w2p, b2p)
    return out[:, :, :np_]


# ----------------------------------------------------------------------------
# Kernel 2: bilinear interpolation (align_corners=False) as  A @ X @ B^T.
#           cb slabs per grid step; bf16 MXU operands / f32 accumulation;
#           no broadcast copy of A (per-slab 2-D dots).
# ----------------------------------------------------------------------------
def _bilinear_kernel(x_ref, a_ref, bt_ref, o_ref):
    # x_ref: [cb, Hin, Win] bf16   a_ref: [Hout, Hin] bf16   bt_ref: [Win, Wout] bf16
    # o_ref: [cb, Hout, Wout]
    cb, hin, win = x_ref.shape
    out_w = bt_ref.shape[1]
    a = a_ref[...]
    if hin % 16 == 0:
        # Width pass as one wide 2-D GEMM over the merged (cb*Hin) rows; the merge is
        # a view because Hin is aligned to the bf16 sublane pack.
        t = jnp.dot(x_ref[...].reshape(cb * hin, win), bt_ref[...],
                    preferred_element_type=jnp.float32)
        t = t.reshape(cb, hin, out_w).astype(jnp.bfloat16)
        for i in range(cb):                    # height pass: per-slab 2-D MXU dots
            o_ref[i] = jnp.dot(a, t[i],
                               preferred_element_type=jnp.float32).astype(o_ref.dtype)
    else:
        # Hin not sublane-aligned: keep both passes per-slab to avoid a relayout copy.
        for i in range(cb):
            ti = jnp.dot(x_ref[i], bt_ref[...], preferred_element_type=jnp.float32)
            o_ref[i] = jnp.dot(a, ti.astype(jnp.bfloat16),
                               preferred_element_type=jnp.float32).astype(o_ref.dtype)


def _bilinear_matrix(out_size, in_size):
    """1-D interpolation matrix matching torch F.interpolate(bilinear, align_corners=False)."""
    scale = in_size / out_size
    i = jnp.arange(out_size, dtype=jnp.float32)
    src = (i + 0.5) * scale - 0.5
    src = jnp.maximum(src, 0.0)                      # torch clamps negative source idx
    i0 = jnp.floor(src).astype(jnp.int32)
    i0 = jnp.minimum(i0, in_size - 1)
    i1 = jnp.minimum(i0 + 1, in_size - 1)
    lam = src - i0.astype(jnp.float32)
    a = (jax.nn.one_hot(i0, in_size, dtype=jnp.float32) * (1.0 - lam)[:, None]
         + jax.nn.one_hot(i1, in_size, dtype=jnp.float32) * lam[:, None])
    return a


def bilinear_resize(x, out_h, out_w, *, out_dtype=jnp.float32):
    """x: [BC, Hin, Win] -> [BC, out_h, out_w], torch bilinear / align_corners=False."""
    bc, hin, win = x.shape
    a = _bilinear_matrix(out_h, hin).astype(jnp.bfloat16)    # [Hout, Hin]
    bt = _bilinear_matrix(out_w, win).T.astype(jnp.bfloat16)  # [Win, Wout]

    vmem_limit = _vmem_limit_bytes()
    out_bytes = out_h * out_w * jnp.dtype(out_dtype).itemsize
    in_bytes = hin * win * 2
    mid_bytes = hin * out_w * 6                     # f32 width-pass result + bf16 copy
    per_slab = 2 * (out_bytes + in_bytes) + mid_bytes        # double-buffered blocks
    resident = (out_h * hin + win * out_w) * 2
    budget = max(per_slab, (2 * vmem_limit) // 3 - resident)
    cb = int(min(budget // per_slab, 16))           # 16 caps the height-pass unroll
    if bc >= 2:
        cb = min(cb, bc // 2)                       # >=2 grid steps -> both v7x TCs busy
    cb = max(1, min(cb, bc))
    bc_pad = _round_up(bc, cb)

    xb = x.astype(jnp.bfloat16)
    if bc_pad != bc:
        xb = jnp.pad(xb, ((0, bc_pad - bc), (0, 0), (0, 0)))

    out = pl.pallas_call(
        _bilinear_kernel,
        out_shape=jax.ShapeDtypeStruct((bc_pad, out_h, out_w), out_dtype),
        grid=(bc_pad // cb,),
        in_specs=[pl.BlockSpec((cb, hin, win), lambda i: (i, 0, 0)),
                  pl.BlockSpec((out_h, hin), lambda i: (0, 0)),      # A resident
                  pl.BlockSpec((win, out_w), lambda i: (0, 0))],     # B^T resident
        out_specs=pl.BlockSpec((cb, out_h, out_w), lambda i: (i, 0, 0)),
        compiler_params=pltpu.CompilerParams(
            dimension_semantics=("parallel",),
            vmem_limit_bytes=vmem_limit),
    )(xb, a, bt)
    return out[:bc]


# ----------------------------------------------------------------------------
# SAM surrogate forward
# ----------------------------------------------------------------------------
class SAMPallas:
    def __init__(self, num_classes, image_size, vit_patch_size, hidden_dim, in_chans=3,
                 key=jax.random.PRNGKey(0)):
        self.num_classes = num_classes
        self.image_size = image_size
        self.patch = vit_patch_size
        self.in_chans = in_chans
        self.hidden = hidden_dim
        k = self.patch * self.patch * in_chans
        k1, k2, _ = jax.random.split(key, 3)
        # deterministic parameter init (synthetic; not a checkpoint load)
        self.w1 = (jax.random.normal(k1, (k, hidden_dim), jnp.float32) * 0.02)
        self.b1 = jnp.zeros((1, hidden_dim), jnp.float32)
        self.w2 = (jax.random.normal(k2, (hidden_dim, num_classes), jnp.float32) * 0.02)
        self.b2 = jnp.zeros((1, num_classes), jnp.float32)

    @functools.partial(jax.jit, static_argnums=(0, 2))
    def forward(self, pixel_values, output_shape):
        # pixel_values: [B, Cin, H, W]  (NCHW, as in PyTorch)
        b, cin, h, w = pixel_values.shape
        p = self.patch
        hp, wp = h // p, w // p
        # im2col for stride==kernel==patch conv (the SAM patch embedding), in bf16 to
        # halve the HBM traffic of the layout change.
        # TODO(synk): this channel-interleaved gather is not expressible as rectangular
        # BlockSpec tiles, so the single relayout pass stays in XLA.
        x = pixel_values.astype(jnp.bfloat16)
        patches = (x.reshape(b, cin, hp, p, wp, p)
                    .transpose(0, 2, 4, 1, 3, 5)
                    .reshape(b, hp * wp, cin * p * p))
        # "pred_masks" surrogate: [B, 1, num_classes, Hp, Wp]; the mask-head kernel
        # already emits the class-minor [B, C, Np] layout, so the reshape below is free.
        logits = mask_head(patches, self.w1, self.b1, self.w2, self.b2)  # [B, C, Np]
        pred_masks = logits.reshape(b, 1, self.num_classes, hp, wp)
        # torch.squeeze(pred_masks, dim=1)
        logit = pred_masks.reshape(b, self.num_classes, hp, wp)
        # F.interpolate(logit, output_shape, mode='bilinear', align_corners=False)
        oh, ow = output_shape
        out = bilinear_resize(logit.reshape(b * self.num_classes, hp, wp), oh, ow)
        return out.reshape(b, self.num_classes, oh, ow)


if __name__ == "__main__":
    key = jax.random.PRNGKey(0)
    B, CIN, IMG, PATCH, NCLS, HID = 2, 3, 16, 4, 4, 32
    pixel_values = jax.random.normal(jax.random.fold_in(key, 1),
                                     (B, CIN, IMG, IMG), jnp.float32)
    model = SAMPallas(num_classes=NCLS, image_size=IMG, vit_patch_size=PATCH,
                      hidden_dim=HID, in_chans=CIN, key=key)
    out = model.forward(pixel_values, (32, 32))
    jax.block_until_ready(out)
    assert out.shape == (B, NCLS, 32, 32)
    print("KERNEL_OK")
</pallas_src>

<mosaic_0001>
module attributes {stable_mosaic.version = 11 : i64} {
  func.func @_mask_head_kernel(%arg0: i32, %arg1: i32, %arg2: memref<1x16x48xbf16, #tpu.memory_space<vmem>>, %arg3: memref<48x32xbf16, #tpu.memory_space<vmem>>, %arg4: memref<1x32xf32, #tpu.memory_space<vmem>>, %arg5: memref<32x128xbf16, #tpu.memory_space<vmem>>, %arg6: memref<1x128xf32, #tpu.memory_space<vmem>>, %arg7: memref<1x4x16xf32, #tpu.memory_space<vmem>>) attributes {dimension_semantics = [#tpu.dimension_semantics<parallel>, #tpu.dimension_semantics<parallel>], iteration_bounds = array<i64: 2, 1>, scalar_prefetch = 0 : i64, scratch_operands = 0 : i64, tpu.core_type = #tpu.core_type<tc>, window_params = [{transform_indices = @transform_0, window_bounds = array<i64: 1, 16, 48>}, {pipeline_mode = #tpu.pipeline_mode<synchronous>, transform_indices = @transform_1, window_bounds = array<i64: 48, 32>}, {pipeline_mode = #tpu.pipeline_mode<synchronous>, transform_indices = @transform_2, window_bounds = array<i64: 1, 32>}, {pipeline_mode = #tpu.pipeline_mode<synchronous>, transform_indices = @transform_3, window_bounds = array<i64: 32, 128>}, {pipeline_mode = #tpu.pipeline_mode<synchronous>, transform_indices = @transform_4, window_bounds = array<i64: 1, 128>}, {transform_indices = @transform_5, window_bounds = array<i64: 1, 4, 16>}]} {
    %c0 = arith.constant 0 : index
    %c0_0 = arith.constant 0 : index
    %c0_1 = arith.constant 0 : index
    %0 = vector.load %arg2[%c0, %c0_0, %c0_1] : memref<1x16x48xbf16, #tpu.memory_space<vmem>>, vector<1x16x48xbf16>
    %1 = vector.shape_cast %0 : vector<1x16x48xbf16> to vector<16x48xbf16>
    %c0_2 = arith.constant 0 : index
    %c0_3 = arith.constant 0 : index
    %2 = vector.load %arg3[%c0_2, %c0_3] : memref<48x32xbf16, #tpu.memory_space<vmem>>, vector<48x32xbf16>
    %cst = arith.constant dense<0.000000e+00> : vector<16x32xf32>
    %3 = tpu.matmul %1, %2, %cst {dimension_numbers = #tpu.dot_dimension_numbers<[1], [0], [0], [1], [0, 0, 1, 1], [], []>} : vector<16x48xbf16>, vector<48x32xbf16>, vector<16x32xf32> -> vector<16x32xf32>
    %c0_4 = arith.constant 0 : index
    %c0_5 = arith.constant 0 : index
    %4 = vector.load %arg4[%c0_4, %c0_5] : memref<1x32xf32, #tpu.memory_space<vmem>>, vector<1x32xf32>
    %5 = vector.broadcast %4 : vector<1x32xf32> to vector<16x32xf32>
    %6 = arith.addf %3, %5 : vector<16x32xf32>
    %7 = arith.mulf %6, %6 : vector<16x32xf32>
    %8 = arith.mulf %6, %7 : vector<16x32xf32>
    %cst_6 = arith.constant 4.471500e-02 : f32
    %9 = vector.broadcast %cst_6 : f32 to vector<16x32xf32>
    %10 = arith.mulf %9, %8 : vector<16x32xf32>
    %11 = arith.addf %6, %10 : vector<16x32xf32>
    %cst_7 = arith.constant 0.797884583 : f32
    %12 = vector.broadcast %cst_7 : f32 to vector<16x32xf32>
    %13 = arith.mulf %12, %11 : vector<16x32xf32>
    %14 = math.tanh %13 : vector<16x32xf32>
    %cst_8 = arith.constant 1.000000e+00 : f32
    %15 = vector.broadcast %cst_8 : f32 to vector<16x32xf32>
    %16 = arith.addf %15, %14 : vector<16x32xf32>
    %cst_9 = arith.constant 5.000000e-01 : f32
    %17 = vector.broadcast %cst_9 : f32 to vector<16x32xf32>
    %18 = arith.mulf %17, %16 : vector<16x32xf32>
    %19 = arith.mulf %6, %18 : vector<16x32xf32>
    %20 = arith.truncf %19 : vector<16x32xf32> to vector<16x32xbf16>
    %c0_10 = arith.constant 0 : index
    %c0_11 = arith.constant 0 : index
    %21 = vector.load %arg5[%c0_10, %c0_11] : memref<32x128xbf16, #tpu.memory_space<vmem>>, vector<32x128xbf16>
    %cst_12 = arith.constant dense<0.000000e+00> : vector<16x128xf32>
    %22 = tpu.matmul %20, %21, %cst_12 {dimension_numbers = #tpu.dot_dimension_numbers<[1], [0], [0], [1], [0, 0, 1, 1], [], []>} : vector<16x32xbf16>, vector<32x128xbf16>, vector<16x128xf32> -> vector<16x128xf32>
    %c0_13 = arith.constant 0 : index
    %c0_14 = arith.constant 0 : index
    %23 = vector.load %arg6[%c0_13, %c0_14] : memref<1x128xf32, #tpu.memory_space<vmem>>, vector<1x128xf32>
    %24 = vector.broadcast %23 : vector<1x128xf32> to vector<16x128xf32>
    %25 = arith.addf %22, %24 : vector<16x128xf32>
    %26 = tpu.transpose %25, [1, 0] : vector<16x128xf32> -> vector<128x16xf32>
    %27 = vector.extract_strided_slice %26 {offsets = [0, 0], sizes = [4, 16], strides = [1, 1]} : vector<128x16xf32> to vector<4x16xf32>
    %c0_15 = arith.constant 0 : index
    %c0_16 = arith.constant 0 : index
    %c0_17 = arith.constant 0 : index
    %28 = vector.load %arg7[%c0_15, %c0_16, %c0_17] : memref<1x4x16xf32, #tpu.memory_space<vmem>>, vector<1x4x16xf32>
    %29 = vector.shape_cast %28 : vector<1x4x16xf32> to vector<4x16xf32>
    %30 = vector.shape_cast %27 : vector<4x16xf32> to vector<1x4x16xf32>
    tpu.vector_store %arg7[%c0_15, %c0_16, %c0_17], %30 {strides = array<i32>} : memref<1x4x16xf32, #tpu.memory_space<vmem>>, vector<1x4x16xf32>,
    return
  }
  func.func @transform_0(%arg0: i32, %arg1: i32) -> (i32, i32, i32) {
    %c0_i32 = arith.constant 0 : i32
    %c0_i32_0 = arith.constant 0 : i32
    return %arg0, %arg1, %c0_i32 : i32, i32, i32
  }
  func.func @transform_1(%arg0: i32, %arg1: i32) -> (i32, i32) {
    %c0_i32 = arith.constant 0 : i32
    %c0_i32_0 = arith.constant 0 : i32
    %c0_i32_1 = arith.constant 0 : i32
    return %c0_i32, %c0_i32_0 : i32, i32
  }
  func.func @transform_2(%arg0: i32, %arg1: i32) -> (i32, i32) {
    %c0_i32 = arith.constant 0 : i32
    %c0_i32_0 = arith.constant 0 : i32
    %c0_i32_1 = arith.constant 0 : i32
    return %c0_i32, %c0_i32_0 : i32, i32
  }
  func.func @transform_3(%arg0: i32, %arg1: i32) -> (i32, i32) {
    %c0_i32 = arith.constant 0 : i32
    %c0_i32_0 = arith.constant 0 : i32
    %c0_i32_1 = arith.constant 0 : i32
    return %c0_i32, %c0_i32_0 : i32, i32
  }
  func.func @transform_4(%arg0: i32, %arg1: i32) -> (i32, i32) {
    %c0_i32 = arith.constant 0 : i32
    %c0_i32_0 = arith.constant 0 : i32
    %c0_i32_1 = arith.constant 0 : i32
    return %c0_i32, %c0_i32_0 : i32, i32
  }
  func.func @transform_5(%arg0: i32, %arg1: i32) -> (i32, i32, i32) {
    %c0_i32 = arith.constant 0 : i32
    %c0_i32_0 = arith.constant 0 : i32
    return %arg0, %c0_i32, %arg1 : i32, i32, i32
  }
}

module attributes {stable_mosaic.version = 11 : i64} {
  func.func @_bilinear_kernel(%arg0: i32, %arg1: memref<4x4x4xbf16, #tpu.memory_space<vmem>>, %arg2: memref<32x4xbf16, #tpu.memory_space<vmem>>, %arg3: memref<4x32xbf16, #tpu.memory_space<vmem>>, %arg4: memref<4x32x32xf32, #tpu.memory_space<vmem>>) attributes {dimension_semantics = [#tpu.dimension_semantics<parallel>], iteration_bounds = array<i64: 2>, scalar_prefetch = 0 : i64, scratch_operands = 0 : i64, tpu.core_type = #tpu.core_type<tc>, window_params = [{transform_indices = @transform_0, window_bounds = array<i64: 4, 4, 4>}, {pipeline_mode = #tpu.pipeline_mode<synchronous>, transform_indices = @transform_1, window_bounds = array<i64: 32, 4>}, {pipeline_mode = #tpu.pipeline_mode<synchronous>, transform_indices = @transform_2, window_bounds = array<i64: 4, 32>}, {transform_indices = @transform_3, window_bounds = array<i64: 4, 32, 32>}]} {
    %c0 = arith.constant 0 : index
    %c0_0 = arith.constant 0 : index
    %0 = vector.load %arg2[%c0, %c0_0] : memref<32x4xbf16, #tpu.memory_space<vmem>>, vector<32x4xbf16>
    %c0_1 = arith.constant 0 : index
    %c0_2 = arith.constant 0 : index
    %c0_3 = arith.constant 0 : index
    %1 = vector.load %arg1[%c0_1, %c0_2, %c0_3] : memref<4x4x4xbf16, #tpu.memory_space<vmem>>, vector<1x4x4xbf16>
    %2 = vector.shape_cast %1 : vector<1x4x4xbf16> to vector<4x4xbf16>
    %c0_4 = arith.constant 0 : index
    %c0_5 = arith.constant 0 : index
    %3 = vector.load %arg3[%c0_4, %c0_5] : memref<4x32xbf16, #tpu.memory_space<vmem>>, vector<4x32xbf16>
    %cst = arith.constant dense<0.000000e+00> : vector<4x32xf32>
    %4 = tpu.matmul %2, %3, %cst {dimension_numbers = #tpu.dot_dimension_numbers<[1], [0], [0], [1], [0, 0, 1, 1], [], []>} : vector<4x4xbf16>, vector<4x32xbf16>, vector<4x32xf32> -> vector<4x32xf32>
    %5 = arith.truncf %4 : vector<4x32xf32> to vector<4x32xbf16>
    %cst_6 = arith.constant dense<0.000000e+00> : vector<32x32xf32>
    %6 = tpu.matmul %0, %5, %cst_6 {dimension_numbers = #tpu.dot_dimension_numbers<[1], [0], [0], [1], [0, 0, 1, 1], [], []>} : vector<32x4xbf16>, vector<4x32xbf16>, vector<32x32xf32> -> vector<32x32xf32>
    %c0_7 = arith.constant 0 : index
    %c0_8 = arith.constant 0 : index
    %c0_9 = arith.constant 0 : index
    %7 = vector.load %arg4[%c0_7, %c0_8, %c0_9] : memref<4x32x32xf32, #tpu.memory_space<vmem>>, vector<1x32x32xf32>
    %8 = vector.shape_cast %7 : vector<1x32x32xf32> to vector<32x32xf32>
    %9 = vector.shape_cast %6 : vector<32x32xf32> to vector<1x32x32xf32>
    tpu.vector_store %arg4[%c0_7, %c0_8, %c0_9], %9 {strides = array<i32>} : memref<4x32x32xf32, #tpu.memory_space<vmem>>, vector<1x32x32xf32>,
    %c1 = arith.constant 1 : index
    %c0_10 = arith.constant 0 : index
    %c0_11 = arith.constant 0 : index
    %10 = vector.load %arg1[%c1, %c0_10, %c0_11] : memref<4x4x4xbf16, #tpu.memory_space<vmem>>, vector<1x4x4xbf16>
    %11 = vector.shape_cast %10 : vector<1x4x4xbf16> to vector<4x4xbf16>
    %c0_12 = arith.constant 0 : index
    %c0_13 = arith.constant 0 : index
    %12 = vector.load %arg3[%c0_12, %c0_13] : memref<4x32xbf16, #tpu.memory_space<vmem>>, vector<4x32xbf16>
    %cst_14 = arith.constant dense<0.000000e+00> : vector<4x32xf32>
    %13 = tpu.matmul %11, %12, %cst_14 {dimension_numbers = #tpu.dot_dimension_numbers<[1], [0], [0], [1], [0, 0, 1, 1], [], []>} : vector<4x4xbf16>, vector<4x32xbf16>, vector<4x32xf32> -> vector<4x32xf32>
    %14 = arith.truncf %13 : vector<4x32xf32> to vector<4x32xbf16>
    %cst_15 = arith.constant dense<0.000000e+00> : vector<32x32xf32>
    %15 = tpu.matmul %0, %14, %cst_15 {dimension_numbers = #tpu.dot_dimension_numbers<[1], [0], [0], [1], [0, 0, 1, 1], [], []>} : vector<32x4xbf16>, vector<4x32xbf16>, vector<32x32xf32> -> vector<32x32xf32>
    %c1_16 = arith.constant 1 : index
    %c0_17 = arith.constant 0 : index
    %c0_18 = arith.constant 0 : index
    %16 = vector.load %arg4[%c1_16, %c0_17, %c0_18] : memref<4x32x32xf32, #tpu.memory_space<vmem>>, vector<1x32x32xf32>
    %17 = vector.shape_cast %16 : vector<1x32x32xf32> to vector<32x32xf32>
    %18 = vector.shape_cast %15 : vector<32x32xf32> to vector<1x32x32xf32>
    tpu.vector_store %arg4[%c1_16, %c0_17, %c0_18], %18 {strides = array<i32>} : memref<4x32x32xf32, #tpu.memory_space<vmem>>, vector<1x32x32xf32>,
    %c2 = arith.constant 2 : index
    %c0_19 = arith.constant 0 : index
    %c0_20 = arith.constant 0 : index
    %19 = vector.load %arg1[%c2, %c0_19, %c0_20] : memref<4x4x4xbf16, #tpu.memory_space<vmem>>, vector<1x4x4xbf16>
    %20 = vector.shape_cast %19 : vector<1x4x4xbf16> to vector<4x4xbf16>
    %c0_21 = arith.constant 0 : index
    %c0_22 = arith.constant 0 : index
    %21 = vector.load %arg3[%c0_21, %c0_22] : memref<4x32xbf16, #tpu.memory_space<vmem>>, vector<4x32xbf16>
    %cst_23 = arith.constant dense<0.000000e+00> : vector<4x32xf32>
    %22 = tpu.matmul %20, %21, %cst_23 {dimension_numbers = #tpu.dot_dimension_numbers<[1], [0], [0], [1], [0, 0, 1, 1], [], []>} : vector<4x4xbf16>, vector<4x32xbf16>, vector<4x32xf32> -> vector<4x32xf32>
    %23 = arith.truncf %22 : vector<4x32xf32> to vector<4x32xbf16>
    %cst_24 = arith.constant dense<0.000000e+00> : vector<32x32xf32>
    %24 = tpu.matmul %0, %23, %cst_24 {dimension_numbers = #tpu.dot_dimension_numbers<[1], [0], [0], [1], [0, 0, 1, 1], [], []>} : vector<32x4xbf16>, vector<4x32xbf16>, vector<32x32xf32> -> vector<32x32xf32>
    %c2_25 = arith.constant 2 : index
    %c0_26 = arith.constant 0 : index
    %c0_27 = arith.constant 0 : index
    %25 = vector.load %arg4[%c2_25, %c0_26, %c0_27] : memref<4x32x32xf32, #tpu.memory_space<vmem>>, vector<1x32x32xf32>
    %26 = vector.shape_cast %25 : vector<1x32x32xf32> to vector<32x32xf32>
    %27 = vector.shape_cast %24 : vector<32x32xf32> to vector<1x32x32xf32>
    tpu.vector_store %arg4[%c2_25, %c0_26, %c0_27], %27 {strides = array<i32>} : memref<4x32x32xf32, #tpu.memory_space<vmem>>, vector<1x32x32xf32>,
    %c3 = arith.constant 3 : index
    %c0_28 = arith.constant 0 : index
    %c0_29 = arith.constant 0 : index
    %28 = vector.load %arg1[%c3, %c0_28, %c0_29] : memref<4x4x4xbf16, #tpu.memory_space<vmem>>, vector<1x4x4xbf16>
    %29 = vector.shape_cast %28 : vector<1x4x4xbf16> to vector<4x4xbf16>
    %c0_30 = arith.constant 0 : index
    %c0_31 = arith.constant 0 : index
    %30 = vector.load %arg3[%c0_30, %c0_31] : memref<4x32xbf16, #tpu.memory_space<vmem>>, vector<4x32xbf16>
    %cst_32 = arith.constant dense<0.000000e+00> : vector<4x32xf32>
    %31 = tpu.matmul %29, %30, %cst_32 {dimension_numbers = #tpu.dot_dimension_numbers<[1], [0], [0], [1], [0, 0, 1, 1], [], []>} : vector<4x4xbf16>, vector<4x32xbf16>, vector<4x32xf32> -> vector<4x32xf32>
    %32 = arith.truncf %31 : vector<4x32xf32> to vector<4x32xbf16>
    %cst_33 = arith.constant dense<0.000000e+00> : vector<32x32xf32>
    %33 = tpu.matmul %0, %32, %cst_33 {dimension_numbers = #tpu.dot_dimension_numbers<[1], [0], [0], [1], [0, 0, 1, 1], [], []>} : vector<32x4xbf16>, vector<4x32xbf16>, vector<32x32xf32> -> vector<32x32xf32>
    %c3_34 = arith.constant 3 : index
    %c0_35 = arith.constant 0 : index
    %c0_36 = arith.constant 0 : index
    %34 = vector.load %arg4[%c3_34, %c0_35, %c0_36] : memref<4x32x32xf32, #tpu.memory_space<vmem>>, vector<1x32x32xf32>
    %35 = vector.shape_cast %34 : vector<1x32x32xf32> to vector<32x32xf32>
    %36 = vector.shape_cast %33 : vector<32x32xf32> to vector<1x32x32xf32>
    tpu.vector_store %arg4[%c3_34, %c0_35, %c0_36], %36 {strides = array<i32>} : memref<4x32x32xf32, #tpu.memory_space<vmem>>, vector<1x32x32xf32>,
    return
  }
  func.func @transform_0(%arg0: i32) -> (i32, i32, i32) {
    %c0_i32 = arith.constant 0 : i32
    %c0_i32_0 = arith.constant 0 : i32
    %c0_i32_1 = arith.constant 0 : i32
    return %arg0, %c0_i32, %c0_i32_0 : i32, i32, i32
  }
  func.func @transform_1(%arg0: i32) -> (i32, i32) {
    %c0_i32 = arith.constant 0 : i32
    %c0_i32_0 = arith.constant 0 : i32
    %c0_i32_1 = arith.constant 0 : i32
    return %c0_i32, %c0_i32_0 : i32, i32
  }
  func.func @transform_2(%arg0: i32) -> (i32, i32) {
    %c0_i32 = arith.constant 0 : i32
    %c0_i32_0 = arith.constant 0 : i32
    %c0_i32_1 = arith.constant 0 : i32
    return %c0_i32, %c0_i32_0 : i32, i32
  }
  func.func @transform_3(%arg0: i32) -> (i32, i32, i32) {
    %c0_i32 = arith.constant 0 : i32
    %c0_i32_0 = arith.constant 0 : i32
    %c0_i32_1 = arith.constant 0 : i32
    return %arg0, %c0_i32, %c0_i32_0 : i32, i32, i32
  }
}

</mosaic_0001>

<llo_original>
// kernel: forward.2
$region0: #{forward.2}
  #allocation0 [shape = 'u32[]', space=smem, size = 0x4, offset = 0x4, fixed_abs, tag = 'smem constant byte address 0x4 - core index']
  #allocation1 [shape = 'u32[144,128]{1,0:T(1,128)}', space=vmem, size = 0x12000, scoped, tag = 'internal scratch']
  %s0 = inlined_call_operand.vmem [shape: bf16[2,16,48], index: 0, kind: input, shape index: {}]
  %s1 = inlined_call_operand.vmem [shape: bf16[48,32], index: 1, kind: input, shape index: {}]
  %s2 = inlined_call_operand.vmem [shape: f32[1,32], index: 2, kind: input, shape index: {}]
  %s3 = inlined_call_operand.vmem [shape: bf16[32,128], index: 3, kind: input, shape index: {}]
  %s4 = inlined_call_operand.vmem [shape: f32[1,128], index: 4, kind: input, shape index: {}]
  %s5 = inlined_call_operand.vmem [shape: f32[2,4,16], index: 5, kind: output, shape index: {}]
  %s6 = sld [smem:[#allocation0]]
  $region53: #{forward.2} parent=0
    _
  %s8 = ssub.s32 1, %s6
  %s9 = scalar_select 0, %s8, %s6
  loop: start=0, step=1, limit=4
  $region2: #{forward.2} parent=0 // loop_pre_header
    _
  $region3: #{forward.2} parent=0 // loop_header
    %s11 = sphi 0, %s15
    %p12 = scmp.ge.s32.totalorder %s11, 4
    %s18 = sphi 0, %s30
    %s19 = sphi 0, %s26
    %s20 = sphi 0, %s18
    %s21 = sphi 0, %s19
    %s22 = sphi 0, %s20
    %s23 = sphi 0, %s21
    %s35 = sphi 0, %s37
    %s38 = sphi 0, %s35
    %s39 = sphi 0, %s38
    %s55 = sphi 0, %s39
    %s59 = sphi 0, %s59
    %s61 = sphi 0, %s59
    %s62 = sphi 0, %s61
    %s76 = sphi 0, %s62
    %s80 = sphi 0, %s80
    %s82 = sphi 0, %s80
    %s83 = sphi 0, %s82
    %s97 = sphi 0, %s83
    %s101 = sphi 0, %s101
    %s103 = sphi 0, %s101
    %s104 = sphi 0, %s103
    %s118 = sphi 0, %s104
    %s122 = sphi 0, %s122
    %s124 = sphi 0, %s122
    %s125 = sphi 0, %s124
    %s139 = sphi 0, %s125
    %s147 = sphi 0, %s149
    %s150 = sphi 0, %s147
    %s151 = sphi 0, %s150
    %s167 = sphi 0, %s151
  $region4: #{forward.2} parent=0 // loop_header_branch
    %14 = sbr.rel (%p12) target = $region8
  $region5: #{forward.2} parent=0 // loop_body
    %s16 = ssub.s32 %s11, 1
    %s17 = ssub.s32 %s11, 2
    %s24 = sadd.s32 1, %s19
    %p25 = scmp.ge.s32.totalorder %s24, 1
    %s26 = scalar_select %p25, 0, %s24
    %s27 = sadd.s32 1, %s18
    %s28 = scalar_select %p25, %s27, %s18
    %p29 = scmp.ge.s32.totalorder %s28, 2
    %s30 = scalar_select %p29, 0, %s28
    %s31 = ssub.s32 %s18, %s30
    %s32 = ssub.s32 %s19, %s26
    %s33 = sor.u32 %s31, %s32
    %p34 = scmp.eq.s32.totalorder %s33, 0
    %s36 = sadd.s32 %s35, 1
    %s37 = scalar_select %p34, %s35, %s36
    %p40 = pneg %p34
    %p41 = scmp.eq.s32.totalorder %s11, 1
    %p42 = por %p40, %p41
    %p43 = scmp.ne.s32.totalorder %s35, %s38
    %p44 = scmp.eq.s32.totalorder %s11, 0
    %p45 = por %p43, %p44
    %p46 = scmp.ne.s32.totalorder %s35, %s38
    %p47 = scmp.eq.s32.totalorder %s16, 1
    %p48 = por %p46, %p47
    %p49 = scmp.ne.s32.totalorder %s38, %s39
    %p50 = scmp.eq.s32.totalorder %s16, 0
    %p51 = por %p49, %p50
    %p52 = scmp.ne.s32.totalorder %s38, %s39
    %p53 = scmp.eq.s32.totalorder %s17, 1
    %p54 = por %p52, %p53
    %p56 = scmp.ne.s32.totalorder %s39, %s55
    %p57 = scmp.eq.s32.totalorder %s17, 0
    %p58 = por %p56, %p57
    %s60 = sadd.s32 %s59, 1
    %p63 = scmp.eq.s32.totalorder %s11, 1
    %p64 = scmp.ne.s32.totalorder %s59, %s61
    %p65 = scmp.eq.s32.totalorder %s11, 0
    %p66 = por %p64, %p65
    %p67 = scmp.ne.s32.totalorder %s59, %s61
    %p68 = scmp.eq.s32.totalorder %s16, 1
    %p69 = por %p67, %p68
    %p70 = scmp.ne.s32.totalorder %s61, %s62
    %p71 = scmp.eq.s32.totalorder %s16, 0
    %p72 = por %p70, %p71
    %p73 = scmp.ne.s32.totalorder %s61, %s62
    %p74 = scmp.eq.s32.totalorder %s17, 1
    %p75 = por %p73, %p74
    %p77 = scmp.ne.s32.totalorder %s62, %s76
    %p78 = scmp.eq.s32.totalorder %s17, 0
    %p79 = por %p77, %p78
    %s81 = sadd.s32 %s80, 1
    %p84 = scmp.eq.s32.totalorder %s11, 1
    %p85 = scmp.ne.s32.totalorder %s80, %s82
    %p86 = scmp.eq.s32.totalorder %s11, 0
    %p87 = por %p85, %p86
    %p88 = scmp.ne.s32.totalorder %s80, %s82
    %p89 = scmp.eq.s32.totalorder %s16, 1
    %p90 = por %p88, %p89
    %p91 = scmp.ne.s32.totalorder %s82, %s83
    %p92 = scmp.eq.s32.totalorder %s16, 0
    %p93 = por %p91, %p92
    %p94 = scmp.ne.s32.totalorder %s82, %s83
    %p95 = scmp.eq.s32.totalorder %s17, 1
    %p96 = por %p94, %p95
    %p98 = scmp.ne.s32.totalorder %s83, %s97
    %p99 = scmp.eq.s32.totalorder %s17, 0
    %p100 = por %p98, %p99
    %s102 = sadd.s32 %s101, 1
    %p105 = scmp.eq.s32.totalorder %s11, 1
    %p106 = scmp.ne.s32.totalorder %s101, %s103
    %p107 = scmp.eq.s32.totalorder %s11, 0
    %p108 = por %p106, %p107
    %p109 = scmp.ne.s32.totalorder %s101, %s103
    %p110 = scmp.eq.s32.totalorder %s16, 1
    %p111 = por %p109, %p110
    %p112 = scmp.ne.s32.totalorder %s103, %s104
    %p113 = scmp.eq.s32.totalorder %s16, 0
    %p114 = por %p112, %p113
    %p115 = scmp.ne.s32.totalorder %s103, %s104
    %p116 = scmp.eq.s32.totalorder %s17, 1
    %p117 = por %p115, %p116
    %p119 = scmp.ne.s32.totalorder %s104, %s118
    %p120 = scmp.eq.s32.totalorder %s17, 0
    %p121 = por %p119, %p120
    %s123 = sadd.s32 %s122, 1
    %p126 = scmp.eq.s32.totalorder %s11, 1
    %p127 = scmp.ne.s32.totalorder %s122, %s124
    %p128 = scmp.eq.s32.totalorder %s11, 0
    %p129 = por %p127, %p128
    %p130 = scmp.ne.s32.totalorder %s122, %s124
    %p131 = scmp.eq.s32.totalorder %s16, 1
    %p132 = por %p130, %p131
    %p133 = scmp.ne.s32.totalorder %s124, %s125
    %p134 = scmp.eq.s32.totalorder %s16, 0
    %p135 = por %p133, %p134
    %p136 = scmp.ne.s32.totalorder %s124, %s125
    %p137 = scmp.eq.s32.totalorder %s17, 1
    %p138 = por %p136, %p137
    %p140 = scmp.ne.s32.totalorder %s125, %s139
    %p141 = scmp.eq.s32.totalorder %s17, 0
    %p142 = por %p140, %p141
    %s143 = ssub.s32 %s18, %s30
    %s144 = ssub.s32 %s19, %s26
    %s145 = sor.u32 %s143, %s144
    %p146 = scmp.eq.s32.totalorder %s145, 0
    %s148 = sadd.s32 %s147, 1
    %s149 = scalar_select %p146, %s147, %s148
    %p152 = pneg %p146
    %p153 = scmp.eq.s32.totalorder %s11, 1
    %p154 = por %p152, %p153
    %p155 = scmp.ne.s32.totalorder %s147, %s150
    %p156 = scmp.eq.s32.totalorder %s11, 0
    %p157 = por %p155, %p156
    %p158 = scmp.ne.s32.totalorder %s147, %s150
    %p159 = scmp.eq.s32.totalorder %s16, 1
    %p160 = por %p158, %p159
    %p161 = scmp.ne.s32.totalorder %s150, %s151
    %p162 = scmp.eq.s32.totalorder %s16, 0
    %p163 = por %p161, %p162
    %p164 = scmp.ne.s32.totalorder %s150, %s151
    %p165 = scmp.eq.s32.totalorder %s17, 1
    %p166 = por %p164, %p165
    %p168 = scmp.ne.s32.totalorder %s151, %s167
    %p169 = scmp.eq.s32.totalorder %s17, 0
    %p170 = por %p168, %p169
    %p171 = scmp.le.s32.totalorder 1, %s11
    %p172 = scmp.lt.s32.totalorder %s11, 3
    %p173 = pnand %p171, %p172
    %p174 = pneg %p173
    // Predicated region
    $region9: #{forward.2} parent=5 // pred_check
      _
    $region10: #{forward.2} parent=5 // pred_check_branch
      %176 = sbr.rel (%p173) target = $region12
    $region11: #{forward.2} parent=5 // pred_region
      %s177 = ssub.s32 %s11, 1
      // Predicated region
      $region13: #{forward.2} parent=11 // pred_check
        %p178 = pneg %p72
      $region14: #{forward.2} parent=11 // pred_check_branch
        %180 = sbr.rel (%p178) target = $region16
      $region15: #{forward.2} parent=11 // pred_region
        _
      $region16: #{forward.2} parent=11 // pred_fallthru
        _
      // Predicated region
      $region17: #{forward.2} parent=11 // pred_check
        %p181 = pneg %p93
      $region18: #{forward.2} parent=11 // pred_check_branch
        %183 = sbr.rel (%p181) target = $region20
      $region19: #{forward.2} parent=11 // pred_region
        _
      $region20: #{forward.2} parent=11 // pred_fallthru
        _
      // Predicated region
      $region21: #{forward.2} parent=11 // pred_check
        %p184 = pneg %p114
      $region22: #{forward.2} parent=11 // pred_check_branch
        %186 = sbr.rel (%p184) target = $region24
      $region23: #{forward.2} parent=11 // pred_region
        _
      $region24: #{forward.2} parent=11 // pred_fallthru
        _
      // Predicated region
      $region25: #{forward.2} parent=11 // pred_check
        %p187 = pneg %p135
      $region26: #{forward.2} parent=11 // pred_check_branch
        %189 = sbr.rel (%p187) target = $region28
      $region27: #{forward.2} parent=11 // pred_region
        _
      $region28: #{forward.2} parent=11 // pred_fallthru
        _
    $region12: #{forward.2} parent=5 // pred_fallthru
      _
    %p190 = scmp.lt.s32.totalorder %s11, 2
    // Predicated region
    $region29: #{forward.2} parent=5 // pred_check
      %p191 = pneg %p190
    $region30: #{forward.2} parent=5 // pred_check_branch
      %193 = sbr.rel (%p191) target = $region32
    $region31: #{forward.2} parent=5 // pred_region
      // Predicated region
      $region33: #{forward.2} parent=31 // pred_check
        %p194 = pneg %p45
      $region34: #{forward.2} parent=31 // pred_check_branch
        %196 = sbr.rel (%p194) target = $region36
      $region35: #{forward.2} parent=31 // pred_region
        %s197 = smul.u32 2, %s19
        %p198 = scmp.lt.s32.totalorder %s18, 1
        %s199 = scalar_select %p198, %s18, 1
        %p200 = scmp.lt.s32.totalorder %s197, 1
        %s201 = scalar_select %p200, %s197, 1
        %s202 = smul.addr %s199, 2
        %s203 = sadd.s32 %s201, %s202
        %s204 = smul.addr %s203, 4
        %s205 = scalar_lea.vmem %s0, %s204
        %s206 = smul.u32 2, %s19
      $region36: #{forward.2} parent=31 // pred_fallthru
        _
    $region32: #{forward.2} parent=5 // pred_fallthru
      _
    %p207 = scmp.le.s32.totalorder 1, %s11
    %p208 = scmp.lt.s32.totalorder %s11, 3
    %p209 = pnand %p207, %p208
    %p210 = pneg %p209
    // Predicated region
    $region37: #{forward.2} parent=5 // pred_check
      _
    $region38: #{forward.2} parent=5 // pred_check_branch
      %212 = sbr.rel (%p209) target = $region40
    $region39: #{forward.2} parent=5 // pred_region
      %s213 = ssub.s32 %s11, 1
      %s214 = smul.u32 2, %s21
      %p215 = scmp.lt.s32.totalorder %s20, 1
      %s216 = scalar_select %p215, %s20, 1
      %p217 = scmp.lt.s32.totalorder %s214, 1
      %s218 = scalar_select %p217, %s214, 1
      %s219 = smul.addr %s216, 2
      %s220 = sadd.s32 %s218, %s219
      %s221 = smul.addr %s220, 4
      %s222 = scalar_lea.vmem %s0, %s221
      %p223 = pneg %p51
      %p224 = pneg %p48
      %p225 = pneg %p72
      %p226 = pneg %p69
      %p227 = pneg %p93
      %p228 = pneg %p90
      %p229 = pneg %p114
      %p230 = pneg %p111
      %p231 = pneg %p135
      %p232 = pneg %p132
      %p233 = pneg %p163
      %p234 = pneg %p160
      %p235 = scmp.lt.s32.totalorder %s20, 1
      %s236 = scalar_select %p235, %s20, 1
      %p237 = scmp.lt.s32.totalorder %s21, 0
      %s238 = scalar_select %p237, %s21, 0
      %s239 = sadd.s32 %s238, %s236
      %s240 = smul.addr %s239, 4
      %s241 = scalar_lea.vmem %s5, %s240
      %s242 = smul.u32 2, %s21
      %p243 = scmp.lt.s32.totalorder %s20, 1
      %s244 = scalar_select %p243, %s20, 1
      %p245 = scmp.lt.s32.totalorder %s242, 1
      %s246 = scalar_select %p245, %s242, 1
      %s247 = smul.addr %s244, 2
      %s248 = sadd.s32 %s246, %s247
      %s249 = smul.addr %s248, 4
      %s250 = scalar_lea.vmem %s0, %s249
      %s251 = smul.u32 2, %s21
      %p252 = scmp.lt.s32.totalorder %s20, 1
      %s253 = scalar_select %p252, %s20, 1
      %p254 = scmp.lt.s32.totalorder %s21, 0
      %s255 = scalar_select %p254, %s21, 0
      %s256 = sadd.s32 %s255, %s253
      %s257 = smul.addr %s256, 4
      %s258 = scalar_lea.vmem %s5, %s257
      %v260 = vld [vmem:[%s250] sm:$0xf]
      %v261 = vld [vmem:[%s250 + $0x4] sm:$0xf]
      %v262 = vld [vmem:[%s1] sm:$0xf]
      %v263 = vld [vmem:[%s1 + $0x4] sm:$0xf]
      %v264 = vld [vmem:[%s1 + $0x8] sm:$0xf]
      %v265 = vld [vmem:[%s1 + $0xc] sm:$0xf]
      %v266 = vld [vmem:[%s1 + $0x10] sm:$0xf]
      %v267 = vld [vmem:[%s1 + $0x14] sm:$0xf]
      %v268 = vld [vmem:[%s2] sm:$0x1]
      %v270 = vlaneseq
      %v271 = vshrl.u32 %v270, 7
      %v272 = vsub.s32 0, %v271
      %v273 = vrot.slane %v268, %v272
      %v277 = vunpack.c.l.b16 %v260
      %v278 = vunpack.c.l.b16 %v261
      %v279 = vpack.c.b16 %v278, %v277
      %v286 = vunpack.c.l.b16 %v262
      %v287 = vunpack.c.l.b16 %v263
      %v288 = vunpack.c.l.b16 %v264
      %v289 = vunpack.c.l.b16 %v265
      %v290 = vunpack.c.l.b16 %v266
      %v291 = vunpack.c.l.b16 %v267
      %v292 = vpack.c.b16 %v287, %v286
      %v293 = vpack.c.b16 %v289, %v288
      %v294 = vpack.c.b16 %v291, %v290
      %vm298 = vcmask 392192
      %v300 = vsel %vm298, %v279, 0
      %302 = vmatprep.subr.bf16.mxu0 0
      %303 = vmatpush1.bf16.msra.mxu0 %v292
      %304 = vmatprep.subr.bf16.mxu0 0
      %305 = vmatpush1.bf16.msra.mxu0 %v293
      %306 = vmatprep.subr.bf16.mxu0 0
      %307 = vmatpush1.bf16.msra.mxu0 %v294
      %308 = vmatprep.subr.bf16.mxu0 0
      %309 = vmatpush1.bf16.msra.mxu0 0
      %310 = vmatprep.subr.bf16.mxu0 0
      %311 = vmatpush1.bf16.msra.mxu0 0
      %312 = vmatprep.subr.bf16.mxu0 0
      %313 = vmatpush1.bf16.msra.mxu0 0
      %314 = vmatprep.subr.bf16.mxu0 0
      %315 = vmatpush1.bf16.msra.mxu0 0
      %316 = vmatprep.subr.bf16.mxu0 0
      %317 = vmatpush1.bf16.msra.mxu0 0
      %318 = vmatprep.subr.bf16.mxu0 0
      %319 = vmatpush1.bf16.msra.mxu0 0
      %320 = vmatprep.subr.bf16.mxu0 0
      %321 = vmatpush1.bf16.msra.mxu0 0
      %322 = vmatprep.subr.bf16.mxu0 0
      %323 = vmatpush1.bf16.msra.mxu0 0
      %324 = vmatprep.subr.bf16.mxu0 0
      %325 = vmatpush1.bf16.msra.mxu0 0
      %326 = vmatprep.subr.bf16.mxu0 0
      %327 = vmatpush1.bf16.msra.mxu0 0
      %328 = vmatprep.subr.bf16.mxu0 0
      %329 = vmatpush1.bf16.msra.mxu0 0
      %330 = vmatprep.subr.bf16.mxu0 0
      %331 = vmatpush1.bf16.msra.mxu0 0
      %332 = vmatprep.subr.bf16.mxu0 0
      %333 = vmatpush1.bf16.msra.mxu0 0
      %334 = vmatprep.mubr.bf16.mxu0 0
      %335 = vmatmul.mubr.bf16.gmra.mrb[0].mxu0 %v300
      %v336 = vpop.f32.mrb[0].mxu0
      %v337 = vadd.f32 %v273, %v336
      %v338 = vpop.f32.mrb[0].mxu0
      %v339 = vpop.f32.mrb[0].mxu0
      %v340 = vadd.f32 %v273, %v339
      %v341 = vpop.f32.mrb[0].mxu0
      %342 = vdwg.mxu0
      %v343 = vmul.f32 %v337, %v337
      %v344 = vmul.f32 %v340, %v340
      %v345 = vmul.f32 %v337, %v343
      %v346 = vmul.f32 %v340, %v344
      %v347 = vmul.f32 %v345, 0.044715
      %v348 = vmul.f32 %v346, 0.044715
      %v349 = vadd.f32 %v337, %v347
      %v350 = vadd.f32 %v340, %v348
      %v351 = vmul.f32 %v349, 0.7978846
      %v352 = vmul.f32 %v350, 0.7978846
      %v353 = vtanh.pop %v351
      %v354 = vtanh.pop %v352
      %v355 = vadd.f32 %v353, 1.0
      %v356 = vadd.f32 %v354, 1.0
      %v357 = vmul.f32 %v355, 0.5
      %v358 = vmul.f32 %v356, 0.5
      %v359 = vmul.f32 %v337, %v357
      %v360 = vmul.f32 %v340, %v358
      %v361 = vpack.c.bf16 %v360, %v359
      %v362 = vld [vmem:[%s3] sm:$0xf]
      %v363 = vld [vmem:[%s3 + $0x4] sm:$0xf]
      %v364 = vld [vmem:[%s3 + $0x8] sm:$0xf]
      %v365 = vld [vmem:[%s3 + $0xc] sm:$0xf]
      %v366 = vld [vmem:[%s4] sm:$0x1]
      %v368 = vlaneseq
      %v369 = vshrl.u32 %v368, 7
      %v370 = vsub.s32 0, %v369
      %v371 = vrot.slane %v366, %v370
      %v377 = vunpack.c.l.b16 %v362
      %v378 = vunpack.c.l.b16 %v363
      %v379 = vunpack.c.l.b16 %v364
      %v380 = vunpack.c.l.b16 %v365
      %v381 = vpack.c.b16 %v378, %v377
      %v382 = vpack.c.b16 %v380, %v379
      %vm385 = vcmask 261120
      %v387 = vsel %vm385, %v361, 0
      %389 = vmatprep.subr.bf16.mxu0 0
      %390 = vmatpush1.bf16.msra.mxu0 %v381
      %391 = vmatprep.subr.bf16.mxu0 0
      %392 = vmatpush1.bf16.msra.mxu0 %v382
      %393 = vmatprep.subr.bf16.mxu0 0
      %394 = vmatpush1.bf16.msra.mxu0 0
      %395 = vmatprep.subr.bf16.mxu0 0
      %396 = vmatpush1.bf16.msra.mxu0 0
      %397 = vmatprep.subr.bf16.mxu0 0
      %398 = vmatpush1.bf16.msra.mxu0 0
      %399 = vmatprep.subr.bf16.mxu0 0
      %400 = vmatpush1.bf16.msra.mxu0 0
      %401 = vmatprep.subr.bf16.mxu0 0
      %402 = vmatpush1.bf16.msra.mxu0 0
      %403 = vmatprep.subr.bf16.mxu0 0
      %404 = vmatpush1.bf16.msra.mxu0 0
      %405 = vmatprep.subr.bf16.mxu0 0
      %406 = vmatpush1.bf16.msra.mxu0 0
      %407 = vmatprep.subr.bf16.mxu0 0
      %408 = vmatpush1.bf16.msra.mxu0 0
      %409 = vmatprep.subr.bf16.mxu0 0
      %410 = vmatpush1.bf16.msra.mxu0 0
      %411 = vmatprep.subr.bf16.mxu0 0
      %412 = vmatpush1.bf16.msra.mxu0 0
      %413 = vmatprep.subr.bf16.mxu0 0
      %414 = vmatpush1.bf16.msra.mxu0 0
      %415 = vmatprep.subr.bf16.mxu0 0
      %416 = vmatpush1.bf16.msra.mxu0 0
      %417 = vmatprep.subr.bf16.mxu0 0
      %418 = vmatpush1.bf16.msra.mxu0 0
      %419 = vmatprep.subr.bf16.mxu0 0
      %420 = vmatpush1.bf16.msra.mxu0 0
      %421 = vmatprep.mubr.bf16.mxu0 0
      %422 = vmatmul.mubr.bf16.gmra.mrb[0].mxu0 %v387
      %v423 = vpop.f32.mrb[0].mxu0
      %v424 = vadd.f32 %v371, %v423
      %v425 = vpop.f32.mrb[0].mxu0
      %v426 = vpop.f32.mrb[0].mxu0
      %v427 = vadd.f32 %v371, %v426
      %v428 = vpop.f32.mrb[0].mxu0
      %429 = vdwg.mxu0
      %430 = vxpose.xlu0.b32.start [1/16] %v424, 128
      %431 = vxpose.xlu0.b32.cont [2/16] %v427, 128
      %432 = vxpose.xlu0.b32.cont [3/16] 0.0, 128
      %433 = vxpose.xlu0.b32.cont [4/16] 0.0, 128
      %434 = vxpose.xlu0.b32.cont [5/16] 0.0, 128
      %435 = vxpose.xlu0.b32.cont [6/16] 0.0, 128
      %436 = vxpose.xlu0.b32.cont [7/16] 0.0, 128
      %437 = vxpose.xlu0.b32.cont [8/16] 0.0, 128
      %438 = vxpose.xlu0.b32.cont [9/16] 0.0, 128
      %439 = vxpose.xlu0.b32.cont [10/16] 0.0, 128
      %440 = vxpose.xlu0.b32.cont [11/16] 0.0, 128
      %441 = vxpose.xlu0.b32.cont [12/16] 0.0, 128
      %442 = vxpose.xlu0.b32.cont [13/16] 0.0, 128
      %443 = vxpose.xlu0.b32.cont [14/16] 0.0, 128
      %444 = vxpose.xlu0.b32.cont [15/16] 0.0, 128
      %445 = vxpose.xlu0.b32.end [16/16] 0.0, 128
      %v446 = vpop.trf.xlu0
      %v447 = vpop.trf.xlu0
      %v448 = vpop.trf.xlu0
      %v449 = vpop.trf.xlu0
      %v450 = vpop.trf.xlu0
      %v451 = vpop.trf.xlu0
      %v452 = vpop.trf.xlu0
      %v453 = vpop.trf.xlu0
      %v454 = vpop.trf.xlu0
      %v455 = vpop.trf.xlu0
      %v456 = vpop.trf.xlu0
      %v457 = vpop.trf.xlu0
      %v458 = vpop.trf.xlu0
      %v459 = vpop.trf.xlu0
      %v460 = vpop.trf.xlu0
      %v461 = vpop.trf.xlu0
      %vm462 = vcmask 125952
      %463 = vst.msk [vmem:[%s258] sm:$0xf] %vm462, %v446
      %p464 = scmp.lt.s32.totalorder %s20, 1
      %s465 = scalar_select %p464, %s20, 1
      %p466 = scmp.lt.s32.totalorder %s21, 0
      %s467 = scalar_select %p466, %s21, 0
      %s468 = sadd.s32 %s467, %s465
      %s469 = smul.addr %s468, 4
      %s470 = scalar_lea.vmem %s5, %s469
      // Predicated region
      $region41: #{forward.2} parent=39 // pred_check
        %p471 = pneg %p160
      $region42: #{forward.2} parent=39 // pred_check_branch
        %473 = sbr.rel (%p471) target = $region44
      $region43: #{forward.2} parent=39 // pred_region
        _
      $region44: #{forward.2} parent=39 // pred_fallthru
        _
    $region40: #{forward.2} parent=5 // pred_fallthru
      _
    %p474 = scmp.le.s32.totalorder 2, %s11
    // Predicated region
    $region45: #{forward.2} parent=5 // pred_check
      %p475 = pneg %p474
    $region46: #{forward.2} parent=5 // pred_check_branch
      %477 = sbr.rel (%p475) target = $region48
    $region47: #{forward.2} parent=5 // pred_region
      %s478 = ssub.s32 %s11, 2
      // Predicated region
      $region49: #{forward.2} parent=47 // pred_check
        %p479 = pneg %p166
      $region50: #{forward.2} parent=47 // pred_check_branch
        %481 = sbr.rel (%p479) target = $region52
      $region51: #{forward.2} parent=47 // pred_region
        %p482 = scmp.lt.s32.totalorder %s22, 1
        %s483 = scalar_select %p482, %s22, 1
        %p484 = scmp.lt.s32.totalorder %s23, 0
        %s485 = scalar_select %p484, %s23, 0
        %s486 = sadd.s32 %s485, %s483
        %s487 = smul.addr %s486, 4
        %s488 = scalar_lea.vmem %s5, %s487
      $region52: #{forward.2} parent=47 // pred_fallthru
        _
    $region48: #{forward.2} parent=5 // pred_fallthru
      _
  $region6: #{forward.2} parent=0 // loop_footer
    %s15 = sadd.s32 1, %s11
  $region7: #{forward.2} parent=0 // loop_footer_branch
    %10 = sbr.rel target = $region3
  $region8: #{forward.2} parent=0 // loop_exit
    _

// kernel: forward.3
$region0: #{forward.3}
  #allocation0 [shape = 'u32[]', space=smem, size = 0x4, offset = 0x4, fixed_abs, tag = 'smem constant byte address 0x4 - core index']
  #allocation1 [shape = 'u32[144,128]{1,0:T(1,128)}', space=vmem, size = 0x12000, scoped, tag = 'internal scratch']
  %s0 = inlined_call_operand.vmem [shape: bf16[8,4,4], index: 0, kind: input, shape index: {}]
  %s1 = inlined_call_operand.vmem [shape: bf16[32,4], index: 1, kind: input, shape index: {}]
  %s2 = inlined_call_operand.vmem [shape: bf16[4,32], index: 2, kind: input, shape index: {}]
  %s3 = inlined_call_operand.hbm [shape: f32[8,32,32], index: 3, kind: output, shape index: {}]
  %s4 = sld [smem:[#allocation0]]
  $region45: #{forward.3} parent=0
    _
  %s6 = ssub.s32 1, %s4
  %s7 = scalar_select 0, %s6, %s4
  $region1: #{forward.3} parent=0
    #allocation2 [shape = 'u8[131072]{0}', space=vmem, size = 0x20000, scoped, tag = 'output window, operand 0']
    #allocation3 [shape = 's32[2]{0}', space=sflag, size = 0x8, scoped, tag = 'scoped memory for forward.3']
    %8 = vsyncpa [#allocation3], 0
    %s9 = scalar_lea.sflag [#allocation3], 1
    %10 = vsyncpa %s9, 0
    loop: start=0, step=1, limit=4
    $region2: #{forward.3} parent=1 // loop_pre_header
      _
    $region3: #{forward.3} parent=1 // loop_header
      %s12 = sphi 0, %s16
      %p13 = scmp.ge.s32.totalorder %s12, 4
      %s22 = sphi 0, %s24
      %s25 = sphi 0, %s22
      %s26 = sphi 0, %s25
      %s42 = sphi 0, %s26
      %s46 = sphi 0, %s46
      %s48 = sphi 0, %s46
      %s49 = sphi 0, %s48
      %s63 = sphi 0, %s49
      %s67 = sphi 0, %s67
      %s69 = sphi 0, %s67
      %s70 = sphi 0, %s69
      %s84 = sphi 0, %s70
      %s90 = sphi 0, %s92
      %s93 = sphi 0, %s90
      %s94 = sphi 0, %s93
      %s110 = sphi 0, %s94
    $region4: #{forward.3} parent=1 // loop_header_branch
      %15 = sbr.rel (%p13) target = $region8
    $region5: #{forward.3} parent=1 // loop_body
      %s17 = ssub.s32 %s12, 1
      %s18 = ssub.s32 %s12, 2
      %s19 = sadd.s32 %s12, 1
      %s20 = ssub.s32 %s12, %s19
      %p21 = scmp.eq.s32.totalorder %s20, 0
      %s23 = sadd.s32 %s22, 1
      %s24 = scalar_select %p21, %s22, %s23
      %p27 = pneg %p21
      %p28 = scmp.eq.s32.totalorder %s12, 1
      %p29 = por %p27, %p28
      %p30 = scmp.ne.s32.totalorder %s22, %s25
      %p31 = scmp.eq.s32.totalorder %s12, 0
      %p32 = por %p30, %p31
      %p33 = scmp.ne.s32.totalorder %s22, %s25
      %p34 = scmp.eq.s32.totalorder %s17, 1
      %p35 = por %p33, %p34
      %p36 = scmp.ne.s32.totalorder %s25, %s26
      %p37 = scmp.eq.s32.totalorder %s17, 0
      %p38 = por %p36, %p37
      %p39 = scmp.ne.s32.totalorder %s25, %s26
      %p40 = scmp.eq.s32.totalorder %s18, 1
      %p41 = por %p39, %p40
      %p43 = scmp.ne.s32.totalorder %s26, %s42
      %p44 = scmp.eq.s32.totalorder %s18, 0
      %p45 = por %p43, %p44
      %s47 = sadd.s32 %s46, 1
      %p50 = scmp.eq.s32.totalorder %s12, 1
      %p51 = scmp.ne.s32.totalorder %s46, %s48
      %p52 = scmp.eq.s32.totalorder %s12, 0
      %p53 = por %p51, %p52
      %p54 = scmp.ne.s32.totalorder %s46, %s48
      %p55 = scmp.eq.s32.totalorder %s17, 1
      %p56 = por %p54, %p55
      %p57 = scmp.ne.s32.totalorder %s48, %s49
      %p58 = scmp.eq.s32.totalorder %s17, 0
      %p59 = por %p57, %p58
      %p60 = scmp.ne.s32.totalorder %s48, %s49
      %p61 = scmp.eq.s32.totalorder %s18, 1
      %p62 = por %p60, %p61
      %p64 = scmp.ne.s32.totalorder %s49, %s63
      %p65 = scmp.eq.s32.totalorder %s18, 0
      %p66 = por %p64, %p65
      %s68 = sadd.s32 %s67, 1
      %p71 = scmp.eq.s32.totalorder %s12, 1
      %p72 = scmp.ne.s32.totalorder %s67, %s69
      %p73 = scmp.eq.s32.totalorder %s12, 0
      %p74 = por %p72, %p73
      %p75 = scmp.ne.s32.totalorder %s67, %s69
      %p76 = scmp.eq.s32.totalorder %s17, 1
      %p77 = por %p75, %p76
      %p78 = scmp.ne.s32.totalorder %s69, %s70
      %p79 = scmp.eq.s32.totalorder %s17, 0
      %p80 = por %p78, %p79
      %p81 = scmp.ne.s32.totalorder %s69, %s70
      %p82 = scmp.eq.s32.totalorder %s18, 1
      %p83 = por %p81, %p82
      %p85 = scmp.ne.s32.totalorder %s70, %s84
      %p86 = scmp.eq.s32.totalorder %s18, 0
      %p87 = por %p85, %p86
      %s88 = ssub.s32 %s12, %s19
      %p89 = scmp.eq.s32.totalorder %s88, 0
      %s91 = sadd.s32 %s90, 1
      %s92 = scalar_select %p89, %s90, %s91
      %p95 = pneg %p89
      %p96 = scmp.eq.s32.totalorder %s12, 1
      %p97 = por %p95, %p96
      %p98 = scmp.ne.s32.totalorder %s90, %s93
      %p99 = scmp.eq.s32.totalorder %s12, 0
      %p100 = por %p98, %p99
      %p101 = scmp.ne.s32.totalorder %s90, %s93
      %p102 = scmp.eq.s32.totalorder %s17, 1
      %p103 = por %p101, %p102
      %p104 = scmp.ne.s32.totalorder %s93, %s94
      %p105 = scmp.eq.s32.totalorder %s17, 0
      %p106 = por %p104, %p105
      %p107 = scmp.ne.s32.totalorder %s93, %s94
      %p108 = scmp.eq.s32.totalorder %s18, 1
      %p109 = por %p107, %p108
      %p111 = scmp.ne.s32.totalorder %s94, %s110
      %p112 = scmp.eq.s32.totalorder %s18, 0
      %p113 = por %p111, %p112
      %p114 = scmp.le.s32.totalorder 1, %s12
      %p115 = scmp.lt.s32.totalorder %s12, 3
      %p116 = pnand %p114, %p115
      %p117 = pneg %p116
      // Predicated region
      $region9: #{forward.3} parent=5 // pred_check
        _
      $region10: #{forward.3} parent=5 // pred_check_branch
        %119 = sbr.rel (%p116) target = $region12
      $region11: #{forward.3} parent=5 // pred_region
        %s120 = ssub.s32 %s12, 1
        // Predicated region
        $region13: #{forward.3} parent=11 // pred_check
          %p121 = pneg %p59
        $region14: #{forward.3} parent=11 // pred_check_branch
          %123 = sbr.rel (%p121) target = $region16
        $region15: #{forward.3} parent=11 // pred_region
          _
        $region16: #{forward.3} parent=11 // pred_fallthru
          _
        // Predicated region
        $region17: #{forward.3} parent=11 // pred_check
          %p124 = pneg %p80
        $region18: #{forward.3} parent=11 // pred_check_branch
          %126 = sbr.rel (%p124) target = $region20
        $region19: #{forward.3} parent=11 // pred_region
          _
        $region20: #{forward.3} parent=11 // pred_fallthru
          _
      $region12: #{forward.3} parent=5 // pred_fallthru
        _
      %p127 = scmp.lt.s32.totalorder %s12, 2
      // Predicated region
      $region21: #{forward.3} parent=5 // pred_check
        %p128 = pneg %p127
      $region22: #{forward.3} parent=5 // pred_check_branch
        %130 = sbr.rel (%p128) target = $region24
      $region23: #{forward.3} parent=5 // pred_region
        // Predicated region
        $region25: #{forward.3} parent=23 // pred_check
          %p131 = pneg %p32
        $region26: #{forward.3} parent=23 // pred_check_branch
          %133 = sbr.rel (%p131) target = $region28
        $region27: #{forward.3} parent=23 // pred_region
          %s134 = smul.u32 4, %s12
          %p135 = scmp.lt.s32.totalorder %s134, 7
          %s136 = scalar_select %p135, %s134, 7
          %s137 = smul.addr %s136, 2
          %s138 = scalar_lea.vmem %s0, %s137
          %s139 = smul.u32 4, %s12
        $region28: #{forward.3} parent=23 // pred_fallthru
          _
      $region24: #{forward.3} parent=5 // pred_fallthru
        _
      %p140 = scmp.le.s32.totalorder 1, %s12
      %p141 = scmp.lt.s32.totalorder %s12, 3
      %p142 = pnand %p140, %p141
      %p143 = pneg %p142
      // Predicated region
      $region29: #{forward.3} parent=5 // pred_check
        _
      $region30: #{forward.3} parent=5 // pred_check_branch
        %145 = sbr.rel (%p142) target = $region32
      $region31: #{forward.3} parent=5 // pred_region
        %s146 = ssub.s32 %s12, 1
        %s147 = smul.u32 4, %s17
        %p148 = scmp.lt.s32.totalorder %s147, 7
        %s149 = scalar_select %p148, %s147, 7
        %s150 = smul.addr %s149, 2
        %s151 = scalar_lea.vmem %s0, %s150
        %p152 = pneg %p38
        %p153 = pneg %p35
        %p154 = pneg %p59
        %p155 = pneg %p56
        %p156 = pneg %p80
        %p157 = pneg %p77
        %p158 = pneg %p106
        %p159 = pneg %p103
        %s160 = sand.u32 %s93, 1
        %s161 = scalar_lea.sflag [#allocation3], %s160
        %s162 = sand.u32 %s93, 1
        %s163 = smul.addr %s162, 128
        %s164 = scalar_lea.vmem [#allocation2], %s163
        %s165 = smul.u32 4, %s17
        %p166 = scmp.lt.s32.totalorder %s165, 7
        %s167 = scalar_select %p166, %s165, 7
        %s168 = smul.addr %s167, 2
        %s169 = scalar_lea.vmem %s0, %s168
        %s170 = smul.u32 4, %s17
        %s171 = smul.u32 4, %s17
        %v173 = vld [vmem:[%s1] sm:$0xf]
        %v174 = vld [vmem:[%s1 + $0x4] sm:$0xf]
        %v175 = vld [vmem:[%s1 + $0x8] sm:$0xf]
        %v176 = vld [vmem:[%s1 + $0xc] sm:$0xf]
        %v177 = vld [vmem:[%s169] sm:$0x3]
        %v178 = vld [vmem:[%s2] sm:$0x3]
        %vm179 = vcmask 31744
        %v181 = vsel %vm179, %v177, 0
        %vm183 = vcmask 1041408
        %v185 = vsel %vm183, %v178, 0
        %187 = vmatprep.subr.bf16.mxu0 0
        %188 = vmatpush1.bf16.msra.mxu0 %v185
        %189 = vmatprep.subr.bf16.mxu0 0
        %190 = vmatpush1.bf16.msra.mxu0 0
        %191 = vmatprep.subr.bf16.mxu0 0
        %192 = vmatpush1.bf16.msra.mxu0 0
        %193 = vmatprep.subr.bf16.mxu0 0
        %194 = vmatpush1.bf16.msra.mxu0 0
        %195 = vmatprep.subr.bf16.mxu0 0
        %196 = vmatpush1.bf16.msra.mxu0 0
        %197 = vmatprep.subr.bf16.mxu0 0
        %198 = vmatpush1.bf16.msra.mxu0 0
        %199 = vmatprep.subr.bf16.mxu0 0
        %200 = vmatpush1.bf16.msra.mxu0 0
        %201 = vmatprep.subr.bf16.mxu0 0
        %202 = vmatpush1.bf16.msra.mxu0 0
        %203 = vmatprep.subr.bf16.mxu0 0
        %204 = vmatpush1.bf16.msra.mxu0 0
        %205 = vmatprep.subr.bf16.mxu0 0
        %206 = vmatpush1.bf16.msra.mxu0 0
        %207 = vmatprep.subr.bf16.mxu0 0
        %208 = vmatpush1.bf16.msra.mxu0 0
        %209 = vmatprep.subr.bf16.mxu0 0
        %210 = vmatpush1.bf16.msra.mxu0 0
        %211 = vmatprep.subr.bf16.mxu0 0
        %212 = vmatpush1.bf16.msra.mxu0 0
        %213 = vmatprep.subr.bf16.mxu0 0
        %214 = vmatpush1.bf16.msra.mxu0 0
        %215 = vmatprep.subr.bf16.mxu0 0
        %216 = vmatpush1.bf16.msra.mxu0 0
        %217 = vmatprep.subr.bf16.mxu0 0
        %218 = vmatpush1.bf16.msra.mxu0 0
        %219 = vmatprep.mubr.bf16.mxu0 0
        %220 = vmatmul.mubr.bf16.gmra.mrb[0].mxu0 %v181
        %v221 = vpop.f32.mrb[0].mxu0
        %v222 = vadd.f32 0.0, %v221
        %v223 = vpop.f32.mrb[0].mxu0
        %v224 = vpop.f32.mrb[0].mxu0
        %v225 = vpop.f32.mrb[0].mxu0
        %226 = vdwg.mxu0
        %v227 = vpack.c.bf16 %v222, %v222
        %v232 = vunpack.c.l.b16 %v173
        %v233 = vunpack.c.l.b16 %v174
        %v234 = vunpack.c.l.b16 %v175
        %v235 = vunpack.c.l.b16 %v176
        %v236 = vpack.c.b16 %v233, %v232
        %v237 = vpack.c.b16 %v235, %v234
        %v239 = vsel %vm179, %v236, 0
        %v242 = vsel %vm179, %v237, 0
        %v245 = vsel %vm183, %v227, 0
        %247 = vmatprep.subr.bf16.mxu0 0
        %248 = vmatpush1.bf16.msra.mxu0 %v245
        %249 = vmatprep.subr.bf16.mxu0 0
        %250 = vmatpush1.bf16.msra.mxu0 0
        %251 = vmatprep.subr.bf16.mxu0 0
        %252 = vmatpush1.bf16.msra.mxu0 0
        %253 = vmatprep.subr.bf16.mxu0 0
        %254 = vmatpush1.bf16.msra.mxu0 0
        %255 = vmatprep.subr.bf16.mxu0 0
        %256 = vmatpush1.bf16.msra.mxu0 0
        %257 = vmatprep.subr.bf16.mxu0 0
        %258 = vmatpush1.bf16.msra.mxu0 0
        %259 = vmatprep.subr.bf16.mxu0 0
        %260 = vmatpush1.bf16.msra.mxu0 0
        %261 = vmatprep.subr.bf16.mxu0 0
        %262 = vmatpush1.bf16.msra.mxu0 0
        %263 = vmatprep.subr.bf16.mxu0 0
        %264 = vmatpush1.bf16.msra.mxu0 0
        %265 = vmatprep.subr.bf16.mxu0 0
        %266 = vmatpush1.bf16.msra.mxu0 0
        %267 = vmatprep.subr.bf16.mxu0 0
        %268 = vmatpush1.bf16.msra.mxu0 0
        %269 = vmatprep.subr.bf16.mxu0 0
        %270 = vmatpush1.bf16.msra.mxu0 0
        %271 = vmatprep.subr.bf16.mxu0 0
        %272 = vmatpush1.bf16.msra.mxu0 0
        %273 = vmatprep.subr.bf16.mxu0 0
        %274 = vmatpush1.bf16.msra.mxu0 0
        %275 = vmatprep.subr.bf16.mxu0 0
        %276 = vmatpush1.bf16.msra.mxu0 0
        %277 = vmatprep.subr.bf16.mxu0 0
        %278 = vmatpush1.bf16.msra.mxu0 0
        %279 = vmatprep.mubr.bf16.mxu0 0
        %280 = vmatmul.mubr.bf16.gmra.mrb[0].mxu0 %v239
        %v281 = vpop.f32.mrb[0].mxu0
        %v282 = vadd.f32 0.0, %v281
        %v283 = vpop.f32.mrb[0].mxu0
        %v284 = vpop.f32.mrb[0].mxu0
        %v285 = vadd.f32 0.0, %v284
        %v286 = vpop.f32.mrb[0].mxu0
        %287 = vmatprep.mubr.bf16.mxu0 0
        %288 = vmatmul.mubr.bf16.gmra.mrb[0].mxu0 %v242
        %v289 = vpop.f32.mrb[0].mxu0
        %v290 = vadd.f32 0.0, %v289
        %v291 = vpop.f32.mrb[0].mxu0
        %v292 = vpop.f32.mrb[0].mxu0
        %v293 = vadd.f32 0.0, %v292
        %v294 = vpop.f32.mrb[0].mxu0
        %295 = vdwg.mxu0
        %vm296 = vcmask 261120
        %297 = vst.msk [vmem:[%s164] sm:$0xff] %vm296, %v282
        %298 = vst.msk [vmem:[%s164 + $0x8] sm:$0xff] %vm296, %v285
        %299 = vst.msk [vmem:[%s164 + $0x10] sm:$0xff] %vm296, %v290
        %300 = vst.msk [vmem:[%s164 + $0x18] sm:$0xff] %vm296, %v293
        %s301 = scalar_lea.vmem %s169, 2
        %v302 = vld [vmem:[%s301] sm:$0x3]
        %v303 = vld [vmem:[%s2] sm:$0x3]
        %v305 = vsel %vm179, %v302, 0
        %v308 = vsel %vm183, %v303, 0
        %310 = vmatprep.subr.bf16.mxu0 0
        %311 = vmatpush1.bf16.msra.mxu0 %v308
        %312 = vmatprep.subr.bf16.mxu0 0
        %313 = vmatpush1.bf16.msra.mxu0 0
        %314 = vmatprep.subr.bf16.mxu0 0
        %315 = vmatpush1.bf16.msra.mxu0 0
        %316 = vmatprep.subr.bf16.mxu0 0
        %317 = vmatpush1.bf16.msra.mxu0 0
        %318 = vmatprep.subr.bf16.mxu0 0
        %319 = vmatpush1.bf16.msra.mxu0 0
        %320 = vmatprep.subr.bf16.mxu0 0
        %321 = vmatpush1.bf16.msra.mxu0 0
        %322 = vmatprep.subr.bf16.mxu0 0
        %323 = vmatpush1.bf16.msra.mxu0 0
        %324 = vmatprep.subr.bf16.mxu0 0
        %325 = vmatpush1.bf16.msra.mxu0 0
        %326 = vmatprep.subr.bf16.mxu0 0
        %327 = vmatpush1.bf16.msra.mxu0 0
        %328 = vmatprep.subr.bf16.mxu0 0
        %329 = vmatpush1.bf16.msra.mxu0 0
        %330 = vmatprep.subr.bf16.mxu0 0
        %331 = vmatpush1.bf16.msra.mxu0 0
        %332 = vmatprep.subr.bf16.mxu0 0
        %333 = vmatpush1.bf16.msra.mxu0 0
        %334 = vmatprep.subr.bf16.mxu0 0
        %335 = vmatpush1.bf16.msra.mxu0 0
        %336 = vmatprep.subr.bf16.mxu0 0
        %337 = vmatpush1.bf16.msra.mxu0 0
        %338 = vmatprep.subr.bf16.mxu0 0
        %339 = vmatpush1.bf16.msra.mxu0 0
        %340 = vmatprep.subr.bf16.mxu0 0
        %341 = vmatpush1.bf16.msra.mxu0 0
        %342 = vmatprep.mubr.bf16.mxu0 0
        %343 = vmatmul.mubr.bf16.gmra.mrb[0].mxu0 %v305
        %v344 = vpop.f32.mrb[0].mxu0
        %v345 = vadd.f32 0.0, %v344
        %v346 = vpop.f32.mrb[0].mxu0
        %v347 = vpop.f32.mrb[0].mxu0
        %v348 = vpop.f32.mrb[0].mxu0
        %349 = vdwg.mxu0
        %v350 = vpack.c.bf16 %v345, %v345
        %v352 = vsel %vm183, %v350, 0
        %354 = vmatprep.subr.bf16.mxu0 0
        %355 = vmatpush1.bf16.msra.mxu0 %v352
        %356 = vmatprep.subr.bf16.mxu0 0
        %357 = vmatpush1.bf16.msra.mxu0 0
        %358 = vmatprep.subr.bf16.mxu0 0
        %359 = vmatpush1.bf16.msra.mxu0 0
        %360 = vmatprep.subr.bf16.mxu0 0
        %361 = vmatpush1.bf16.msra.mxu0 0
        %362 = vmatprep.subr.bf16.mxu0 0
        %363 = vmatpush1.bf16.msra.mxu0 0
        %364 = vmatprep.subr.bf16.mxu0 0
        %365 = vmatpush1.bf16.msra.mxu0 0
        %366 = vmatprep.subr.bf16.mxu0 0
        %367 = vmatpush1.bf16.msra.mxu0 0
        %368 = vmatprep.subr.bf16.mxu0 0
        %369 = vmatpush1.bf16.msra.mxu0 0
        %370 = vmatprep.subr.bf16.mxu0 0
        %371 = vmatpush1.bf16.msra.mxu0 0
        %372 = vmatprep.subr.bf16.mxu0 0
        %373 = vmatpush1.bf16.msra.mxu0 0
        %374 = vmatprep.subr.bf16.mxu0 0
        %375 = vmatpush1.bf16.msra.mxu0 0
        %376 = vmatprep.subr.bf16.mxu0 0
        %377 = vmatpush1.bf16.msra.mxu0 0
        %378 = vmatprep.subr.bf16.mxu0 0
        %379 = vmatpush1.bf16.msra.mxu0 0
        %380 = vmatprep.subr.bf16.mxu0 0
        %381 = vmatpush1.bf16.msra.mxu0 0
        %382 = vmatprep.subr.bf16.mxu0 0
        %383 = vmatpush1.bf16.msra.mxu0 0
        %384 = vmatprep.subr.bf16.mxu0 0
        %385 = vmatpush1.bf16.msra.mxu0 0
        %386 = vmatprep.mubr.bf16.mxu0 0
        %387 = vmatmul.mubr.bf16.gmra.mrb[0].mxu0 %v239
        %v388 = vpop.f32.mrb[0].mxu0
        %v389 = vadd.f32 0.0, %v388
        %v390 = vpop.f32.mrb[0].mxu0
        %v391 = vpop.f32.mrb[0].mxu0
        %v392 = vadd.f32 0.0, %v391
        %v393 = vpop.f32.mrb[0].mxu0
        %394 = vmatprep.mubr.bf16.mxu0 0
        %395 = vmatmul.mubr.bf16.gmra.mrb[0].mxu0 %v242
        %v396 = vpop.f32.mrb[0].mxu0
        %v397 = vadd.f32 0.0, %v396
        %v398 = vpop.f32.mrb[0].mxu0
        %v399 = vpop.f32.mrb[0].mxu0
        %v400 = vadd.f32 0.0, %v399
        %v401 = vpop.f32.mrb[0].mxu0
        %402 = vdwg.mxu0
        %s403 = scalar_lea.vmem %s164, 32 [#allocation2]
        %404 = vst.msk [vmem:[%s403] sm:$0xff] %vm296, %v389
        %405 = vst.msk [vmem:[%s403 + $0x8] sm:$0xff] %vm296, %v392
        %406 = vst.msk [vmem:[%s403 + $0x10] sm:$0xff] %vm296, %v397
        %407 = vst.msk [vmem:[%s403 + $0x18] sm:$0xff] %vm296, %v400
        %s408 = scalar_lea.vmem %s169, 4
        %v409 = vld [vmem:[%s408] sm:$0x3]
        %v410 = vld [vmem:[%s2] sm:$0x3]
        %v412 = vsel %vm179, %v409, 0
        %v415 = vsel %vm183, %v410, 0
        %417 = vmatprep.subr.bf16.mxu0 0
        %418 = vmatpush1.bf16.msra.mxu0 %v415
        %419 = vmatprep.subr.bf16.mxu0 0
        %420 = vmatpush1.bf16.msra.mxu0 0
        %421 = vmatprep.subr.bf16.mxu0 0
        %422 = vmatpush1.bf16.msra.mxu0 0
        %423 = vmatprep.subr.bf16.mxu0 0
        %424 = vmatpush1.bf16.msra.mxu0 0
        %425 = vmatprep.subr.bf16.mxu0 0
        %426 = vmatpush1.bf16.msra.mxu0 0
        %427 = vmatprep.subr.bf16.mxu0 0
        %428 = vmatpush1.bf16.msra.mxu0 0
        %429 = vmatprep.subr.bf16.mxu0 0
        %430 = vmatpush1.bf16.msra.mxu0 0
        %431 = vmatprep.subr.bf16.mxu0 0
        %432 = vmatpush1.bf16.msra.mxu0 0
        %433 = vmatprep.subr.bf16.mxu0 0
        %434 = vmatpush1.bf16.msra.mxu0 0
        %435 = vmatprep.subr.bf16.mxu0 0
        %436 = vmatpush1.bf16.msra.mxu0 0
        %437 = vmatprep.subr.bf16.mxu0 0
        %438 = vmatpush1.bf16.msra.mxu0 0
        %439 = vmatprep.subr.bf16.mxu0 0
        %440 = vmatpush1.bf16.msra.mxu0 0
        %441 = vmatprep.subr.bf16.mxu0 0
        %442 = vmatpush1.bf16.msra.mxu0 0
        %443 = vmatprep.subr.bf16.mxu0 0
        %444 = vmatpush1.bf16.msra.mxu0 0
        %445 = vmatprep.subr.bf16.mxu0 0
        %446 = vmatpush1.bf16.msra.mxu0 0
        %447 = vmatprep.subr.bf16.mxu0 0
        %448 = vmatpush1.bf16.msra.mxu0 0
        %449 = vmatprep.mubr.bf16.mxu0 0
        %450 = vmatmul.mubr.bf16.gmra.mrb[0].mxu0 %v412
        %v451 = vpop.f32.mrb[0].mxu0
        %v452 = vadd.f32 0.0, %v451
        %v453 = vpop.f32.mrb[0].mxu0
        %v454 = vpop.f32.mrb[0].mxu0
        %v455 = vpop.f32.mrb[0].mxu0
        %456 = vdwg.mxu0
        %v457 = vpack.c.bf16 %v452, %v452
        %v459 = vsel %vm183, %v457, 0
        %461 = vmatprep.subr.bf16.mxu0 0
        %462 = vmatpush1.bf16.msra.mxu0 %v459
        %463 = vmatprep.subr.bf16.mxu0 0
        %464 = vmatpush1.bf16.msra.mxu0 0
        %465 = vmatprep.subr.bf16.mxu0 0
        %466 = vmatpush1.bf16.msra.mxu0 0
        %467 = vmatprep.subr.bf16.mxu0 0
        %468 = vmatpush1.bf16.msra.mxu0 0
        %469 = vmatprep.subr.bf16.mxu0 0
        %470 = vmatpush1.bf16.msra.mxu0 0
        %471 = vmatprep.subr.bf16.mxu0 0
        %472 = vmatpush1.bf16.msra.mxu0 0
        %473 = vmatprep.subr.bf16.mxu0 0
        %474 = vmatpush1.bf16.msra.mxu0 0
        %475 = vmatprep.subr.bf16.mxu0 0
        %476 = vmatpush1.bf16.msra.mxu0 0
        %477 = vmatprep.subr.bf16.mxu0 0
        %478 = vmatpush1.bf16.msra.mxu0 0
        %479 = vmatprep.subr.bf16.mxu0 0
        %480 = vmatpush1.bf16.msra.mxu0 0
        %481 = vmatprep.subr.bf16.mxu0 0
        %482 = vmatpush1.bf16.msra.mxu0 0
        %483 = vmatprep.subr.bf16.mxu0 0
        %484 = vmatpush1.bf16.msra.mxu0 0
        %485 = vmatprep.subr.bf16.mxu0 0
        %486 = vmatpush1.bf16.msra.mxu0 0
        %487 = vmatprep.subr.bf16.mxu0 0
        %488 = vmatpush1.bf16.msra.mxu0 0
        %489 = vmatprep.subr.bf16.mxu0 0
        %490 = vmatpush1.bf16.msra.mxu0 0
        %491 = vmatprep.subr.bf16.mxu0 0
        %492 = vmatpush1.bf16.msra.mxu0 0
        %493 = vmatprep.mubr.bf16.mxu0 0
        %494 = vmatmul.mubr.bf16.gmra.mrb[0].mxu0 %v239
        %v495 = vpop.f32.mrb[0].mxu0
        %v496 = vadd.f32 0.0, %v495
        %v497 = vpop.f32.mrb[0].mxu0
        %v498 = vpop.f32.mrb[0].mxu0
        %v499 = vadd.f32 0.0, %v498
        %v500 = vpop.f32.mrb[0].mxu0
        %501 = vmatprep.mubr.bf16.mxu0 0
        %502 = vmatmul.mubr.bf16.gmra.mrb[0].mxu0 %v242
        %v503 = vpop.f32.mrb[0].mxu0
        %v504 = vadd.f32 0.0, %v503
        %v505 = vpop.f32.mrb[0].mxu0
        %v506 = vpop.f32.mrb[0].mxu0
        %v507 = vadd.f32 0.0, %v506
        %v508 = vpop.f32.mrb[0].mxu0
        %509 = vdwg.mxu0
        %s510 = scalar_lea.vmem %s164, 64 [#allocation2]
        %511 = vst.msk [vmem:[%s510] sm:$0xff] %vm296, %v496
        %512 = vst.msk [vmem:[%s510 + $0x8] sm:$0xff] %vm296, %v499
        %513 = vst.msk [vmem:[%s510 + $0x10] sm:$0xff] %vm296, %v504
        %514 = vst.msk [vmem:[%s510 + $0x18] sm:$0xff] %vm296, %v507
        %s515 = scalar_lea.vmem %s169, 6
        %v516 = vld [vmem:[%s515] sm:$0x3]
        %v517 = vld [vmem:[%s2] sm:$0x3]
        %v519 = vsel %vm179, %v516, 0
        %v522 = vsel %vm183, %v517, 0
        %524 = vmatprep.subr.bf16.mxu0 0
        %525 = vmatpush1.bf16.msra.mxu0 %v522
        %526 = vmatprep.subr.bf16.mxu0 0
        %527 = vmatpush1.bf16.msra.mxu0 0
        %528 = vmatprep.subr.bf16.mxu0 0
        %529 = vmatpush1.bf16.msra.mxu0 0
        %530 = vmatprep.subr.bf16.mxu0 0
        %531 = vmatpush1.bf16.msra.mxu0 0
        %532 = vmatprep.subr.bf16.mxu0 0
        %533 = vmatpush1.bf16.msra.mxu0 0
        %534 = vmatprep.subr.bf16.mxu0 0
        %535 = vmatpush1.bf16.msra.mxu0 0
        %536 = vmatprep.subr.bf16.mxu0 0
        %537 = vmatpush1.bf16.msra.mxu0 0
        %538 = vmatprep.subr.bf16.mxu0 0
        %539 = vmatpush1.bf16.msra.mxu0 0
        %540 = vmatprep.subr.bf16.mxu0 0
        %541 = vmatpush1.bf16.msra.mxu0 0
        %542 = vmatprep.subr.bf16.mxu0 0
        %543 = vmatpush1.bf16.msra.mxu0 0
        %544 = vmatprep.subr.bf16.mxu0 0
        %545 = vmatpush1.bf16.msra.mxu0 0
        %546 = vmatprep.subr.bf16.mxu0 0
        %547 = vmatpush1.bf16.msra.mxu0 0
        %548 = vmatprep.subr.bf16.mxu0 0
        %549 = vmatpush1.bf16.msra.mxu0 0
        %550 = vmatprep.subr.bf16.mxu0 0
        %551 = vmatpush1.bf16.msra.mxu0 0
        %552 = vmatprep.subr.bf16.mxu0 0
        %553 = vmatpush1.bf16.msra.mxu0 0
        %554 = vmatprep.subr.bf16.mxu0 0
        %555 = vmatpush1.bf16.msra.mxu0 0
        %556 = vmatprep.mubr.bf16.mxu0 0
        %557 = vmatmul.mubr.bf16.gmra.mrb[0].mxu0 %v519
        %v558 = vpop.f32.mrb[0].mxu0
        %v559 = vadd.f32 0.0, %v558
        %v560 = vpop.f32.mrb[0].mxu0
        %v561 = vpop.f32.mrb[0].mxu0
        %v562 = vpop.f32.mrb[0].mxu0
        %563 = vdwg.mxu0
        %v564 = vpack.c.bf16 %v559, %v559
        %v566 = vsel %vm183, %v564, 0
        %568 = vmatprep.subr.bf16.mxu0 0
        %569 = vmatpush1.bf16.msra.mxu0 %v566
        %570 = vmatprep.subr.bf16.mxu0 0
        %571 = vmatpush1.bf16.msra.mxu0 0
        %572 = vmatprep.subr.bf16.mxu0 0
        %573 = vmatpush1.bf16.msra.mxu0 0
        %574 = vmatprep.subr.bf16.mxu0 0
        %575 = vmatpush1.bf16.msra.mxu0 0
        %576 = vmatprep.subr.bf16.mxu0 0
        %577 = vmatpush1.bf16.msra.mxu0 0
        %578 = vmatprep.subr.bf16.mxu0 0
        %579 = vmatpush1.bf16.msra.mxu0 0
        %580 = vmatprep.subr.bf16.mxu0 0
        %581 = vmatpush1.bf16.msra.mxu0 0
        %582 = vmatprep.subr.bf16.mxu0 0
        %583 = vmatpush1.bf16.msra.mxu0 0
        %584 = vmatprep.subr.bf16.mxu0 0
        %585 = vmatpush1.bf16.msra.mxu0 0
        %586 = vmatprep.subr.bf16.mxu0 0
        %587 = vmatpush1.bf16.msra.mxu0 0
        %588 = vmatprep.subr.bf16.mxu0 0
        %589 = vmatpush1.bf16.msra.mxu0 0
        %590 = vmatprep.subr.bf16.mxu0 0
        %591 = vmatpush1.bf16.msra.mxu0 0
        %592 = vmatprep.subr.bf16.mxu0 0
        %593 = vmatpush1.bf16.msra.mxu0 0
        %594 = vmatprep.subr.bf16.mxu0 0
        %595 = vmatpush1.bf16.msra.mxu0 0
        %596 = vmatprep.subr.bf16.mxu0 0
        %597 = vmatpush1.bf16.msra.mxu0 0
        %598 = vmatprep.subr.bf16.mxu0 0
        %599 = vmatpush1.bf16.msra.mxu0 0
        %600 = vmatprep.mubr.bf16.mxu0 0
        %601 = vmatmul.mubr.bf16.gmra.mrb[0].mxu0 %v239
        %v602 = vpop.f32.mrb[0].mxu0
        %v603 = vadd.f32 0.0, %v602
        %v604 = vpop.f32.mrb[0].mxu0
        %v605 = vpop.f32.mrb[0].mxu0
        %v606 = vadd.f32 0.0, %v605
        %v607 = vpop.f32.mrb[0].mxu0
        %608 = vmatprep.mubr.bf16.mxu0 0
        %609 = vmatmul.mubr.bf16.gmra.mrb[0].mxu0 %v242
        %v610 = vpop.f32.mrb[0].mxu0
        %v611 = vadd.f32 0.0, %v610
        %v612 = vpop.f32.mrb[0].mxu0
        %v613 = vpop.f32.mrb[0].mxu0
        %v614 = vadd.f32 0.0, %v613
        %v615 = vpop.f32.mrb[0].mxu0
        %616 = vdwg.mxu0
        %s617 = scalar_lea.vmem %s164, 96 [#allocation2]
        %618 = vst.msk [vmem:[%s617] sm:$0xff] %vm296, %v603
        %619 = vst.msk [vmem:[%s617 + $0x8] sm:$0xff] %vm296, %v606
        %620 = vst.msk [vmem:[%s617 + $0x10] sm:$0xff] %vm296, %v611
        %621 = vst.msk [vmem:[%s617 + $0x18] sm:$0xff] %vm296, %v614
        %s622 = sand.u32 %s93, 1
        %s623 = scalar_lea.sflag [#allocation3], %s622
        %s624 = sand.u32 %s93, 1
        %s625 = smul.addr %s624, 128
        %s626 = scalar_lea.vmem [#allocation2], %s625
        // Predicated region
        $region33: #{forward.3} parent=31 // pred_check
          %p627 = pneg %p103
        $region34: #{forward.3} parent=31 // pred_check_branch
          %629 = sbr.rel (%p627) target = $region36
        $region35: #{forward.3} parent=31 // pred_region
          %s630 = smul.u32 4, %s17
          %s632 = ssub.s32 2048, 2048
          %633 = vsyncadd %s623, %s632
          %s634 = smul.addr %s630, 4
          %s635 = smul.addr %s634, 128
          %s636 = scalar_lea.hbm %s3, %s635
          %s637 = sshll.u32 %s626, 4
          %s638 = int_to_ptr.vmem [resolvable:$true] %s637
          %643 = dma.vmem_to_hbm [thread:$0]  %s638, 2048, %s636, %s623, 128, 128, 8
        $region36: #{forward.3} parent=31 // pred_fallthru
          _
      $region32: #{forward.3} parent=5 // pred_fallthru
        _
      %p644 = scmp.le.s32.totalorder 2, %s12
      // Predicated region
      $region37: #{forward.3} parent=5 // pred_check
        %p645 = pneg %p644
      $region38: #{forward.3} parent=5 // pred_check_branch
        %647 = sbr.rel (%p645) target = $region40
      $region39: #{forward.3} parent=5 // pred_region
        %s648 = ssub.s32 %s12, 2
        // Predicated region
        $region41: #{forward.3} parent=39 // pred_check
          %p649 = pneg %p109
        $region42: #{forward.3} parent=39 // pred_check_branch
          %651 = sbr.rel (%p649) target = $region44
        $region43: #{forward.3} parent=39 // pred_region
          %s652 = sand.u32 %s94, 1
          %s653 = scalar_lea.sflag [#allocation3], %s652
          %s654 = sand.u32 %s94, 1
          %s655 = smul.addr %s654, 128
          %s656 = scalar_lea.vmem [#allocation2], %s655
          %657 = dma.done %s653, 2048
        $region44: #{forward.3} parent=39 // pred_fallthru
          _
      $region40: #{forward.3} parent=5 // pred_fallthru
        _
    $region6: #{forward.3} parent=1 // loop_footer
      %s16 = sadd.s32 1, %s12
    $region7: #{forward.3} parent=1 // loop_footer_branch
      %11 = sbr.rel target = $region3
    $region8: #{forward.3} parent=1 // loop_exit
      _
    %658 = vsyncpa [#allocation3], 1
    %s659 = scalar_lea.sflag [#allocation3], 1
    %660 = vsyncpa %s659, 1

</llo_original>
